<compile_context>
chip_gen: v6e
topology: v6e:2x2x1
jax: 0.10.0
libtpu: 0.0.40
codegen_flags: <defaults>
</compile_context>

<pallas_src>
import math

import jax
import jax.numpy as jnp
from jax.experimental import pallas as pl
from jax.experimental.pallas import tpu as pltpu

_LANE = 128                 # vreg lane width
_MAX_COLS = 1024            # slab lane-width cap (>=128 lanes -> unmasked vst)
_SMALL_BYTES = 512 * 1024   # below this: one block, pipelining not worth it
_MIN_STEPS = 4              # >= 2 x (2 TCs on v7x): both cores busy + DMA overlap


def _copy_kernel(x_ref, o_ref):
    # Identity copy of one (block_rows, cols) tile.
    o_ref[...] = x_ref[...]


def _sublane_multiple(dtype):
    # Packed-tile minimum sublanes per dtype width.
    return {4: 8, 2: 16, 1: 32}.get(jnp.dtype(dtype).itemsize, 8)


def _resolve_out_shape(total, out_shape):
    out_shape = tuple(int(d) for d in out_shape)
    if out_shape.count(-1) > 1:
        raise ValueError(f"only one -1 allowed in out_shape, got {out_shape}")
    if -1 in out_shape:
        known = math.prod(d for d in out_shape if d != -1)
        if known <= 0 or total % known != 0:
            raise ValueError(f"cannot reshape {total} elements into {out_shape}")
        out_shape = tuple(total // known if d == -1 else d for d in out_shape)
    if math.prod(out_shape) != total:
        raise ValueError(f"reshape size mismatch: {total} vs {out_shape}")
    return out_shape


def _vmem_budget():
    """(target block bytes, scoped-VMEM limit) picked from the chip's VMEM size."""
    try:
        vmem_cap = int(pltpu.get_tpu_info().vmem_capacity_bytes)
    except Exception:  # interpret mode / unknown target
        vmem_cap = 64 << 20
    # Pipeline footprint = 2 buffers x (in + out) = 4 x block; leave headroom.
    target = max(2 << 20, min(8 << 20, vmem_cap // 8))      # 8 MiB on >=64 MiB VMEM
    limit = min(vmem_cap - (8 << 20), 6 * target)           # e.g. 48 MiB
    return target, limit


def _pick_cols(total):
    """Largest power-of-two multiple of 128 dividing `total`, capped at 1024 lanes."""
    cols = _LANE
    while cols * 2 <= _MAX_COLS and total % (cols * 2) == 0:
        cols *= 2
    return cols


def _pallas_copy_2d(x2, *, donate_input=False):
    """Identity copy of a lane-dense (rows, cols) slab (cols % 128 == 0)."""
    rows, cols = x2.shape
    itemsize = x2.dtype.itemsize
    sub = _sublane_multiple(x2.dtype)
    target_block, vmem_limit = _vmem_budget()

    total_bytes = rows * cols * itemsize
    if total_bytes <= _SMALL_BYTES or rows <= sub:
        block_rows = rows                                  # single full block
    else:
        by_bytes = max(sub, target_block // (cols * itemsize))
        by_steps = max(sub, pl.cdiv(rows, _MIN_STEPS))     # >= _MIN_STEPS grid steps
        block_rows = (min(by_bytes, by_steps) // sub) * sub
        block_rows = max(sub, min(block_rows, rows))
    grid = (pl.cdiv(rows, block_rows),)                    # ragged last block is OK

    return pl.pallas_call(
        _copy_kernel,
        out_shape=jax.ShapeDtypeStruct((rows, cols), x2.dtype),
        grid_spec=pl.GridSpec(
            grid=grid,
            in_specs=[pl.BlockSpec((block_rows, cols), lambda i: (i, 0))],
            out_specs=pl.BlockSpec((block_rows, cols), lambda i: (i, 0)),
        ),
        # Alias only when the caller explicitly donates the input.  Default off:
        # otherwise XLA inserts a hidden defensive full copy, and an aliased
        # result defeats the purpose of a materializing reshape.
        input_output_aliases=({0: 0} if donate_input else {}),
        cost_estimate=pl.CostEstimate(
            flops=0, transcendentals=0, bytes_accessed=2 * total_bytes),
        compiler_params=pltpu.CompilerParams(
            dimension_semantics=("parallel",),   # shards grid across TCs on v7x
            vmem_limit_bytes=vmem_limit),
    )(x2)


def pallas_reshape(x, out_shape, *, donate_input=False):
    """Reshape `x` (row-major order) to `out_shape` via a Pallas copy kernel."""
    total = x.size
    out_shape = _resolve_out_shape(total, out_shape)

    # Ragged totals (not a multiple of 128 lanes): a contiguous reshape is
    # metadata-only in XLA anyway, and pad+slice would cost ~3x the HBM
    # traffic of the aligned kernel path -- just fall back.
    if total == 0 or total % _LANE != 0:
        return jnp.reshape(x, out_shape)

    cols = _pick_cols(total)
    rows = total // cols
    out2 = _pallas_copy_2d(x.reshape(rows, cols), donate_input=donate_input)
    return out2.reshape(out_shape)


class PallasReshape:
    """Pallas analogue of the PyTorch Reshape module."""

    def __init__(self, out_shape):
        self.out_shape = tuple(out_shape)

    def __call__(self, inp):
        self.in_shape = (-1, *inp.shape[1:])
        return pallas_reshape(inp, self.out_shape)

    def inverse(self, inp):
        return pallas_reshape(inp, self.in_shape)


if __name__ == "__main__":
    key = jax.random.PRNGKey(0)

    # Typical use case: flatten MaxPool output (N, C, H, W) into (N, C*H*W).
    x = jax.random.normal(key, (2, 4, 16, 16), dtype=jnp.float32)
    mod = PallasReshape((2, -1))
    y = mod(x)
    jax.block_until_ready(y)

    y_ref = jnp.reshape(x, (2, 4 * 16 * 16))
    assert y.shape == y_ref.shape, (y.shape, y_ref.shape)
    assert y.dtype == y_ref.dtype
    assert bool(jnp.array_equal(y, y_ref))

    # inverse() round-trip (matches the PyTorch module's inverse()).
    x_back = mod.inverse(y)
    jax.block_until_ready(x_back)
    assert bool(jnp.array_equal(x_back, x))

    # Multi-block path (> 512 KiB -> >= 4 grid steps, pipelined copy).
    xm = jax.random.normal(jax.random.PRNGKey(2), (8, 128, 256), dtype=jnp.float32)
    ym = pallas_reshape(xm, (8, -1))
    jax.block_until_ready(ym)
    assert bool(jnp.array_equal(ym, jnp.reshape(xm, (8, 128 * 256))))

    # bf16 + ragged (non-128-aligned) total exercises the jnp.reshape fallback.
    xb = jax.random.normal(jax.random.PRNGKey(1), (3, 5, 7), dtype=jnp.bfloat16)
    yb = pallas_reshape(xb, (5, -1))
    jax.block_until_ready(yb)
    assert bool(jnp.array_equal(yb, jnp.reshape(xb, (5, 21))))

    print("KERNEL_OK")
</pallas_src>

<mosaic_0001>
module attributes {stable_mosaic.version = 11 : i64} {
  func.func @_copy_kernel(%arg0: i32, %arg1: memref<2x1024xf32, #tpu.memory_space<vmem>>, %arg2: memref<2x1024xf32, #tpu.memory_space<vmem>>) attributes {dimension_semantics = [#tpu.dimension_semantics<parallel>], iteration_bounds = array<i64: 1>, scalar_prefetch = 0 : i64, scratch_operands = 0 : i64, tpu.core_type = #tpu.core_type<tc>, window_params = [{transform_indices = @transform_0, window_bounds = array<i64: 2, 1024>}, {transform_indices = @transform_1, window_bounds = array<i64: 2, 1024>}]} {
    %c0 = arith.constant 0 : index
    %c0_0 = arith.constant 0 : index
    %0 = vector.load %arg1[%c0, %c0_0] : memref<2x1024xf32, #tpu.memory_space<vmem>>, vector<2x1024xf32>
    %c0_1 = arith.constant 0 : index
    %c0_2 = arith.constant 0 : index
    %1 = vector.load %arg2[%c0_1, %c0_2] : memref<2x1024xf32, #tpu.memory_space<vmem>>, vector<2x1024xf32>
    tpu.vector_store %arg2[%c0_1, %c0_2], %0 {strides = array<i32>} : memref<2x1024xf32, #tpu.memory_space<vmem>>, vector<2x1024xf32>,
    return
  }
  func.func @transform_0(%arg0: i32) -> (i32, i32) {
    %c0_i32 = arith.constant 0 : i32
    %c0_i32_0 = arith.constant 0 : i32
    return %arg0, %c0_i32 : i32, i32
  }
  func.func @transform_1(%arg0: i32) -> (i32, i32) {
    %c0_i32 = arith.constant 0 : i32
    %c0_i32_0 = arith.constant 0 : i32
    return %arg0, %c0_i32 : i32, i32
  }
}

</mosaic_0001>

<llo_original>
// kernel: tpu_custom_call.1
$region0: #{tpu_custom_call.1}
  #allocation0 [shape = 'u32[]', space=smem, size = 0x4, offset = 0x4, fixed_abs, tag = 'smem constant byte address 0x4 - core index']
  #allocation1 [shape = 'u32[144,128]{1,0:T(1,128)}', space=vmem, size = 0x12000, scoped, tag = 'internal scratch']
  %s0 = inlined_call_operand.hbm [shape: f32[2,1024], index: 0, kind: input, shape index: {}]
  %s1 = inlined_call_operand.hbm [shape: f32[2,1024], index: 1, kind: output, shape index: {}]
  %s2 = sld [smem:[#allocation0]]
  $region18: #{tpu_custom_call.1} parent=0
    _
  %s4 = ssub.s32 1, %s2
  %s5 = scalar_select 0, %s4, %s2
  $region1: #{tpu_custom_call.1} parent=0
    #allocation2 [shape = 'u8[8192]{0}', space=vmem, size = 0x2000, scoped, tag = 'input window, operand 0, single buffered']
    #allocation3 [shape = 's32[1]{0}', space=sflag, size = 0x4, scoped, tag = 'scoped memory for tpu_custom_call.1']
    #allocation4 [shape = 's32[1]{0}', space=sflag, size = 0x4, scoped, tag = 'scoped memory for tpu_custom_call.1']
    #allocation5 [shape = 'u8[8192]{0}', space=vmem, size = 0x2000, scoped, tag = 'output window, operand 0, single buffered']
    %6 = vsyncpa [#allocation3], 0
    %7 = vsyncpa [#allocation4], 0
    // Predicated region
    $region2: #{tpu_custom_call.1} parent=1 // pred_check
      _
    $region3: #{tpu_custom_call.1} parent=1 // pred_check_branch
      %9 = sbr.rel (0) target = $region5
    $region4: #{tpu_custom_call.1} parent=1 // pred_region
      %s11 = ssub.s32 256, 256
      %12 = vsyncadd [#allocation3], %s11
      %s14 = sshll.u32 [#allocation2], 4
      %s15 = int_to_ptr.vmem [resolvable:$true] %s14
      %17 = dma.hbm_to_vmem [thread:$0]  %s0, 256, %s15, [#allocation3]
    $region5: #{tpu_custom_call.1} parent=1 // pred_fallthru
      _
    // Predicated region
    $region6: #{tpu_custom_call.1} parent=1 // pred_check
      _
    $region7: #{tpu_custom_call.1} parent=1 // pred_check_branch
      %19 = sbr.rel (0) target = $region9
    $region8: #{tpu_custom_call.1} parent=1 // pred_region
      %20 = dma.done [#allocation3], 256
    $region9: #{tpu_custom_call.1} parent=1 // pred_fallthru
      _
    %v21 = vld [vmem:[#allocation2] sm:$0xff]
    %v22 = vld [vmem:[#allocation2 + $0x8] sm:$0xff]
    %23 = vst [vmem:[#allocation5] sm:$0xff] %v21
    %24 = vst [vmem:[#allocation5 + $0x8] sm:$0xff] %v22
    // Predicated region
    $region10: #{tpu_custom_call.1} parent=1 // pred_check
      _
    $region11: #{tpu_custom_call.1} parent=1 // pred_check_branch
      %26 = sbr.rel (0) target = $region13
    $region12: #{tpu_custom_call.1} parent=1 // pred_region
      %s28 = ssub.s32 256, 256
      %29 = vsyncadd [#allocation4], %s28
      %s31 = sshll.u32 [#allocation5], 4
      %s32 = int_to_ptr.vmem [resolvable:$true] %s31
      %34 = dma.vmem_to_hbm [thread:$0]  %s32, 256, %s1, [#allocation4]
    $region13: #{tpu_custom_call.1} parent=1 // pred_fallthru
      _
    // Predicated region
    $region14: #{tpu_custom_call.1} parent=1 // pred_check
      _
    $region15: #{tpu_custom_call.1} parent=1 // pred_check_branch
      %36 = sbr.rel (0) target = $region17
    $region16: #{tpu_custom_call.1} parent=1 // pred_region
      %37 = dma.done [#allocation4], 256
    $region17: #{tpu_custom_call.1} parent=1 // pred_fallthru
      _
    %38 = vsyncpa [#allocation3], 1
    %39 = vsyncpa [#allocation4], 1

</llo_original>
